<compile_context>
chip_gen: v7x
topology: tpu7x:2x2x1
jax: 0.10.0
libtpu: 0.0.40
codegen_flags: <defaults>
</compile_context>

<pallas_src>
import functools

import jax
import jax.numpy as jnp
from jax.experimental import pallas as pl
from jax.experimental.pallas import tpu as pltpu

MARGIN = 0.2
MAXNORM = 1e-5
RENORM_EPS = 1e-7     # torch.renorm adds 1e-7 to the denominator
SCALE = 100000.0


def _triplet_kernel(a_ref, p_ref, n_ref, sum_ref, cnt_ref, *, total_rows, margin):
    """One batch tile: (TILE_B, D) -> per-tile (loss_sum, count) partials."""
    tile_b = a_ref.shape[0]

    # Cast in-kernel (inputs may be bf16/fp16); all math in f32.
    a = a_ref[...].astype(jnp.float32)
    p = p_ref[...].astype(jnp.float32)
    n = n_ref[...].astype(jnp.float32)

    def renorm_factor(x):
        # torch.renorm(2, 0, 1e-5).mul(1e5) folded into a single per-row factor.
        nrm = jnp.sqrt(jnp.sum(x * x, axis=1, keepdims=True))          # (tile_b, 1)
        clipped = MAXNORM * pl.reciprocal(nrm + RENORM_EPS, approx=True)
        return jnp.where(nrm > MAXNORM, clipped, 1.0) * SCALE          # (tile_b, 1)

    fa = renorm_factor(a)
    ra = a * fa                              # renormed anchor (reused twice)
    dap = ra - p * renorm_factor(p)          # renorm fused into the subtraction,
    dan = ra - n * renorm_factor(n)          # no renormed p/n slabs materialized

    d_ap = jnp.sqrt(jnp.sum(dap * dap, axis=1, keepdims=True))         # (tile_b, 1)
    d_an = jnp.sqrt(jnp.sum(dan * dan, axis=1, keepdims=True))         # (tile_b, 1)
    diff = d_ap - d_an

    # Mask out rows past the true batch size (last tile may be ragged; the
    # padded rows hold unspecified data and may produce NaN/Inf -- jnp.where
    # is a select, so nothing leaks into the partial sums).
    row0 = pl.program_id(0) * tile_b
    rows = row0 + jax.lax.broadcasted_iota(jnp.int32, (tile_b, 1), 0)
    valid = rows < total_rows

    mask = (diff < margin) & valid           # hard-sample mining
    per_row = jnp.maximum(diff + margin, 0.0)

    loss_sum = jnp.sum(jnp.where(mask, per_row, 0.0))
    cnt = jnp.sum(jnp.where(mask, 1.0, 0.0))

    # Lane/sublane-aligned partial writeback (full (8,128) unmasked stores).
    sum_ref[...] = jnp.broadcast_to(loss_sum, sum_ref.shape)
    cnt_ref[...] = jnp.broadcast_to(cnt, cnt_ref.shape)


def _choose_tile_b(b, d, dtype):
    """Pick a batch tile: multiple of 8 (or the full batch), VMEM-safe on all gens."""
    if b <= 8:
        return b
    bytes_per_elem = jnp.dtype(dtype).itemsize
    # 3 inputs x 2 pipeline buffers per row; keep under ~12 MiB so the default
    # scoped VMEM limit works everywhere (v5e 16 MiB, v6e/v7x 32 MiB).
    budget = 12 * 1024 * 1024
    per_row = 6 * d * bytes_per_elem
    max_rows = max(8, budget // per_row)
    tile = min(b, max_rows, 1024)
    if tile >= b:
        return b                       # full batch (full array dim is always legal)
    return max(8, (tile // 8) * 8)


def triplet_loss(f_anchor, f_positive, f_negative, *, margin=MARGIN, tile_b=None):
    """f_* : (B, C, H, W) (or any batch-first shape) feature tensors."""
    b = f_anchor.shape[0]
    a2 = f_anchor.reshape(b, -1)       # free view for contiguous NCHW
    p2 = f_positive.reshape(b, -1)
    n2 = f_negative.reshape(b, -1)
    d = a2.shape[1]

    if tile_b is None:
        tile_b = _choose_tile_b(b, d, a2.dtype)
    tile_b = min(tile_b, b)
    if tile_b != b and tile_b % 8 != 0:
        raise ValueError("tile_b must be a multiple of 8 or equal to the batch size")

    num_tiles = (b + tile_b - 1) // tile_b

    kernel = functools.partial(_triplet_kernel, total_rows=b, margin=margin)

    in_spec = pl.BlockSpec((tile_b, d), lambda i: (i, 0))
    part_spec = pl.BlockSpec((1, 8, 128), lambda i: (i, 0, 0))
    part_shape = jax.ShapeDtypeStruct((num_tiles, 8, 128), jnp.float32)

    itemsize = jnp.dtype(a2.dtype).itemsize
    cost = pl.CostEstimate(
        flops=int(16 * b * d),                                   # mostly VPU mul/add
        transcendentals=int(8 * b),                              # sqrt / rcp per row
        bytes_accessed=int(3 * b * d * itemsize + 2 * num_tiles * 8 * 128 * 4),
    )

    sums, cnts = pl.pallas_call(
        kernel,
        out_shape=(part_shape, part_shape),
        grid_spec=pltpu.PrefetchScalarGridSpec(
            num_scalar_prefetch=0,
            grid=(num_tiles,),
            in_specs=[in_spec, in_spec, in_spec],
            out_specs=[part_spec, part_spec],
        ),
        compiler_params=pltpu.CompilerParams(
            # Per-tile partials are independent -> batch axis can shard across
            # both TensorCores on v7x; no-op on single-TC chips.
            dimension_semantics=("parallel",)),
        cost_estimate=cost,
    )(a2, p2, n2)

    total = jnp.sum(sums[:, 0, 0])
    count = jnp.sum(cnts[:, 0, 0])
    # 0/0 -> NaN mirrors torch .mean() of an empty tensor (no hard samples).
    return total / count


# ----------------------------- reference & test -----------------------------

def _reference(f_anchor, f_positive, f_negative, margin=MARGIN):
    """Pure-JAX reproduction of the PyTorch module (exact division)."""
    b = f_anchor.shape[0]

    def renorm(x):
        x = x.reshape(b, -1).astype(jnp.float32)
        nrm = jnp.sqrt(jnp.sum(x * x, axis=1, keepdims=True))
        fac = jnp.where(nrm > MAXNORM, MAXNORM / (nrm + RENORM_EPS), 1.0)
        return x * fac * SCALE

    a = renorm(f_anchor)
    p = renorm(f_positive)
    n = renorm(f_negative)
    d_ap = jnp.linalg.norm(a - p, axis=1)
    d_an = jnp.linalg.norm(a - n, axis=1)
    mask = (d_ap - d_an) < margin
    per = jnp.maximum(d_ap - d_an + margin, 0.0)
    return jnp.sum(jnp.where(mask, per, 0.0)) / jnp.sum(mask.astype(jnp.float32))


def _make_inputs(key, b, c, h, w, dtype=jnp.float32, noise=0.05):
    """Rows cycle through three well-separated regimes so the hard-sample mask
    and the clamp both take each branch, far away from the decision boundary."""
    k1, k2, k3, k4, k5 = jax.random.split(key, 5)
    base = jax.random.normal(k1, (b, c, h, w), jnp.float32)
    far_p = jax.random.normal(k2, (b, c, h, w), jnp.float32)
    far_n = jax.random.normal(k3, (b, c, h, w), jnp.float32)
    near_p = base + noise * jax.random.normal(k4, (b, c, h, w), jnp.float32)
    near_n = base + noise * jax.random.normal(k5, (b, c, h, w), jnp.float32)
    r = jnp.arange(b).reshape(b, 1, 1, 1)
    # r%3==0: both far   -> diff ~ 0    (selected, positive contribution)
    # r%3==1: pos near   -> diff ~ -1.2 (selected, clamped to 0)
    # r%3==2: neg near   -> diff ~ +1.2 (not selected)
    fp = jnp.where(r % 3 == 1, near_p, far_p)
    fn = jnp.where(r % 3 == 2, near_n, far_n)
    return base.astype(dtype), fp.astype(dtype), fn.astype(dtype)


if __name__ == "__main__":
    key = jax.random.PRNGKey(0)
    k_a, k_b = jax.random.split(key)

    # Case 1: f32 features, auto tile (single tile at this tiny size —
    # fixed-overhead bound by design).
    fa, fp, fn = _make_inputs(k_a, 8, 4, 8, 8, jnp.float32)
    out = triplet_loss(fa, fp, fn)
    jax.block_until_ready(out)
    ref = _reference(fa, fp, fn)
    assert bool(jnp.isfinite(ref)), "test data should select at least one row"
    assert jnp.allclose(out, ref, rtol=2e-2, atol=2e-3), (out, ref)

    # Case 2: bf16 features, forced 8-row tile -> 3 grid steps with a ragged
    # last tile (exercises the multi-tile partial path, the parallel batch
    # axis and the in-kernel f32 cast).
    ga, gp, gn = _make_inputs(k_b, 20, 3, 8, 8, jnp.bfloat16)
    out2 = triplet_loss(ga, gp, gn, tile_b=8)
    jax.block_until_ready(out2)
    ref2 = _reference(ga, gp, gn)
    assert jnp.allclose(out2, ref2, rtol=2e-2, atol=2e-3), (out2, ref2)

    print("KERNEL_OK")
</pallas_src>

<mosaic_0001>
module attributes {stable_mosaic.version = 11 : i64} {
  func.func @_triplet_kernel(%arg0: i32, %arg1: memref<8x256xf32, #tpu.memory_space<vmem>>, %arg2: memref<8x256xf32, #tpu.memory_space<vmem>>, %arg3: memref<8x256xf32, #tpu.memory_space<vmem>>, %arg4: memref<1x8x128xf32, #tpu.memory_space<vmem>>, %arg5: memref<1x8x128xf32, #tpu.memory_space<vmem>>) attributes {dimension_semantics = [#tpu.dimension_semantics<parallel>], iteration_bounds = array<i64: 1>, scalar_prefetch = 0 : i64, scratch_operands = 0 : i64, tpu.core_type = #tpu.core_type<tc>, window_params = [{transform_indices = @transform_0, window_bounds = array<i64: 8, 256>}, {transform_indices = @transform_1, window_bounds = array<i64: 8, 256>}, {transform_indices = @transform_2, window_bounds = array<i64: 8, 256>}, {transform_indices = @transform_3, window_bounds = array<i64: 1, 8, 128>}, {transform_indices = @transform_4, window_bounds = array<i64: 1, 8, 128>}]} {
    %c0 = arith.constant 0 : index
    %c0_0 = arith.constant 0 : index
    %0 = vector.load %arg1[%c0, %c0_0] : memref<8x256xf32, #tpu.memory_space<vmem>>, vector<8x256xf32>
    %c0_1 = arith.constant 0 : index
    %c0_2 = arith.constant 0 : index
    %1 = vector.load %arg2[%c0_1, %c0_2] : memref<8x256xf32, #tpu.memory_space<vmem>>, vector<8x256xf32>
    %c0_3 = arith.constant 0 : index
    %c0_4 = arith.constant 0 : index
    %2 = vector.load %arg3[%c0_3, %c0_4] : memref<8x256xf32, #tpu.memory_space<vmem>>, vector<8x256xf32>
    %3 = arith.mulf %0, %0 : vector<8x256xf32>
    %cst = arith.constant dense<0.000000e+00> : vector<8xf32>
    %4 = vector.multi_reduction <add>, %3, %cst [1] : vector<8x256xf32> to vector<8xf32>
    %5 = vector.shape_cast %4 : vector<8xf32> to vector<8x1xf32>
    %6 = math.sqrt %5 : vector<8x1xf32>
    %cst_5 = arith.constant 1.000000e-07 : f32
    %7 = vector.broadcast %cst_5 : f32 to vector<8x1xf32>
    %8 = arith.addf %6, %7 : vector<8x1xf32>
    %9 = tpu.reciprocal %8 {approx = true} : vector<8x1xf32> -> vector<8x1xf32>
    %cst_6 = arith.constant 9.99999974E-6 : f32
    %10 = vector.broadcast %cst_6 : f32 to vector<8x1xf32>
    %11 = arith.mulf %10, %9 : vector<8x1xf32>
    %cst_7 = arith.constant 9.99999974E-6 : f32
    %12 = vector.broadcast %cst_7 : f32 to vector<8x1xf32>
    %13 = arith.cmpf ogt, %6, %12 : vector<8x1xf32>
    %cst_8 = arith.constant 1.000000e+00 : f32
    %14 = vector.broadcast %cst_8 : f32 to vector<8x1xf32>
    %15 = arith.select %13, %11, %14 : vector<8x1xi1>, vector<8x1xf32>
    %cst_9 = arith.constant 1.000000e+05 : f32
    %16 = vector.broadcast %cst_9 : f32 to vector<8x1xf32>
    %17 = arith.mulf %15, %16 : vector<8x1xf32>
    %18 = vector.broadcast %17 : vector<8x1xf32> to vector<8x256xf32>
    %19 = arith.mulf %0, %18 : vector<8x256xf32>
    %20 = arith.mulf %1, %1 : vector<8x256xf32>
    %cst_10 = arith.constant dense<0.000000e+00> : vector<8xf32>
    %21 = vector.multi_reduction <add>, %20, %cst_10 [1] : vector<8x256xf32> to vector<8xf32>
    %22 = vector.shape_cast %21 : vector<8xf32> to vector<8x1xf32>
    %23 = math.sqrt %22 : vector<8x1xf32>
    %cst_11 = arith.constant 1.000000e-07 : f32
    %24 = vector.broadcast %cst_11 : f32 to vector<8x1xf32>
    %25 = arith.addf %23, %24 : vector<8x1xf32>
    %26 = tpu.reciprocal %25 {approx = true} : vector<8x1xf32> -> vector<8x1xf32>
    %cst_12 = arith.constant 9.99999974E-6 : f32
    %27 = vector.broadcast %cst_12 : f32 to vector<8x1xf32>
    %28 = arith.mulf %27, %26 : vector<8x1xf32>
    %cst_13 = arith.constant 9.99999974E-6 : f32
    %29 = vector.broadcast %cst_13 : f32 to vector<8x1xf32>
    %30 = arith.cmpf ogt, %23, %29 : vector<8x1xf32>
    %cst_14 = arith.constant 1.000000e+00 : f32
    %31 = vector.broadcast %cst_14 : f32 to vector<8x1xf32>
    %32 = arith.select %30, %28, %31 : vector<8x1xi1>, vector<8x1xf32>
    %cst_15 = arith.constant 1.000000e+05 : f32
    %33 = vector.broadcast %cst_15 : f32 to vector<8x1xf32>
    %34 = arith.mulf %32, %33 : vector<8x1xf32>
    %35 = vector.broadcast %34 : vector<8x1xf32> to vector<8x256xf32>
    %36 = arith.mulf %1, %35 : vector<8x256xf32>
    %37 = arith.subf %19, %36 : vector<8x256xf32>
    %38 = arith.mulf %2, %2 : vector<8x256xf32>
    %cst_16 = arith.constant dense<0.000000e+00> : vector<8xf32>
    %39 = vector.multi_reduction <add>, %38, %cst_16 [1] : vector<8x256xf32> to vector<8xf32>
    %40 = vector.shape_cast %39 : vector<8xf32> to vector<8x1xf32>
    %41 = math.sqrt %40 : vector<8x1xf32>
    %cst_17 = arith.constant 1.000000e-07 : f32
    %42 = vector.broadcast %cst_17 : f32 to vector<8x1xf32>
    %43 = arith.addf %41, %42 : vector<8x1xf32>
    %44 = tpu.reciprocal %43 {approx = true} : vector<8x1xf32> -> vector<8x1xf32>
    %cst_18 = arith.constant 9.99999974E-6 : f32
    %45 = vector.broadcast %cst_18 : f32 to vector<8x1xf32>
    %46 = arith.mulf %45, %44 : vector<8x1xf32>
    %cst_19 = arith.constant 9.99999974E-6 : f32
    %47 = vector.broadcast %cst_19 : f32 to vector<8x1xf32>
    %48 = arith.cmpf ogt, %41, %47 : vector<8x1xf32>
    %cst_20 = arith.constant 1.000000e+00 : f32
    %49 = vector.broadcast %cst_20 : f32 to vector<8x1xf32>
    %50 = arith.select %48, %46, %49 : vector<8x1xi1>, vector<8x1xf32>
    %cst_21 = arith.constant 1.000000e+05 : f32
    %51 = vector.broadcast %cst_21 : f32 to vector<8x1xf32>
    %52 = arith.mulf %50, %51 : vector<8x1xf32>
    %53 = vector.broadcast %52 : vector<8x1xf32> to vector<8x256xf32>
    %54 = arith.mulf %2, %53 : vector<8x256xf32>
    %55 = arith.subf %19, %54 : vector<8x256xf32>
    %56 = arith.mulf %37, %37 : vector<8x256xf32>
    %cst_22 = arith.constant dense<0.000000e+00> : vector<8xf32>
    %57 = vector.multi_reduction <add>, %56, %cst_22 [1] : vector<8x256xf32> to vector<8xf32>
    %58 = vector.shape_cast %57 : vector<8xf32> to vector<8x1xf32>
    %59 = math.sqrt %58 : vector<8x1xf32>
    %60 = arith.mulf %55, %55 : vector<8x256xf32>
    %cst_23 = arith.constant dense<0.000000e+00> : vector<8xf32>
    %61 = vector.multi_reduction <add>, %60, %cst_23 [1] : vector<8x256xf32> to vector<8xf32>
    %62 = vector.shape_cast %61 : vector<8xf32> to vector<8x1xf32>
    %63 = math.sqrt %62 : vector<8x1xf32>
    %64 = arith.subf %59, %63 : vector<8x1xf32>
    %c8_i32 = arith.constant 8 : i32
    %65 = arith.muli %arg0, %c8_i32 : i32
    %66 = tpu.iota {dimensions = array<i32: 0>} : vector<8x1xi32>
    %67 = vector.broadcast %65 : i32 to vector<8x1xi32>
    %68 = arith.addi %67, %66 : vector<8x1xi32>
    %c8_i32_24 = arith.constant 8 : i32
    %69 = vector.broadcast %c8_i32_24 : i32 to vector<8x1xi32>
    %70 = arith.cmpi slt, %68, %69 : vector<8x1xi32>
    %cst_25 = arith.constant 2.000000e-01 : f32
    %71 = vector.broadcast %cst_25 : f32 to vector<8x1xf32>
    %72 = arith.cmpf olt, %64, %71 : vector<8x1xf32>
    %73 = arith.andi %72, %70 : vector<8x1xi1>
    %cst_26 = arith.constant 2.000000e-01 : f32
    %74 = vector.broadcast %cst_26 : f32 to vector<8x1xf32>
    %75 = arith.addf %64, %74 : vector<8x1xf32>
    %cst_27 = arith.constant 0.000000e+00 : f32
    %76 = vector.broadcast %cst_27 : f32 to vector<8x1xf32>
    %77 = arith.maximumf %75, %76 : vector<8x1xf32>
    %cst_28 = arith.constant 0.000000e+00 : f32
    %78 = vector.broadcast %cst_28 : f32 to vector<8x1xf32>
    %79 = arith.select %73, %77, %78 : vector<8x1xi1>, vector<8x1xf32>
    %80 = vector.shape_cast %79 : vector<8x1xf32> to vector<1x8x1xf32>
    %cst_29 = arith.constant dense<0.000000e+00> : vector<1xf32>
    %81 = vector.multi_reduction <add>, %80, %cst_29 [1, 2] : vector<1x8x1xf32> to vector<1xf32>
    %82 = vector.shape_cast %81 : vector<1xf32> to vector<1x1x1xf32>
    %83 = vector.extract %82[0, 0, 0] : f32 from vector<1x1x1xf32>
    %cst_30 = arith.constant 1.000000e+00 : f32
    %cst_31 = arith.constant 0.000000e+00 : f32
    %84 = vector.broadcast %cst_30 : f32 to vector<8x1xf32>
    %85 = vector.broadcast %cst_31 : f32 to vector<8x1xf32>
    %86 = arith.select %73, %84, %85 : vector<8x1xi1>, vector<8x1xf32>
    %87 = vector.shape_cast %86 : vector<8x1xf32> to vector<1x8x1xf32>
    %cst_32 = arith.constant dense<0.000000e+00> : vector<1xf32>
    %88 = vector.multi_reduction <add>, %87, %cst_32 [1, 2] : vector<1x8x1xf32> to vector<1xf32>
    %89 = vector.shape_cast %88 : vector<1xf32> to vector<1x1x1xf32>
    %90 = vector.extract %89[0, 0, 0] : f32 from vector<1x1x1xf32>
    %91 = vector.broadcast %83 : f32 to vector<1x8x128xf32>
    %c0_33 = arith.constant 0 : index
    %c0_34 = arith.constant 0 : index
    %c0_35 = arith.constant 0 : index
    %92 = vector.load %arg4[%c0_33, %c0_34, %c0_35] : memref<1x8x128xf32, #tpu.memory_space<vmem>>, vector<1x8x128xf32>
    tpu.vector_store %arg4[%c0_33, %c0_34, %c0_35], %91 {strides = array<i32>} : memref<1x8x128xf32, #tpu.memory_space<vmem>>, vector<1x8x128xf32>,
    %93 = vector.broadcast %90 : f32 to vector<1x8x128xf32>
    %c0_36 = arith.constant 0 : index
    %c0_37 = arith.constant 0 : index
    %c0_38 = arith.constant 0 : index
    %94 = vector.load %arg5[%c0_36, %c0_37, %c0_38] : memref<1x8x128xf32, #tpu.memory_space<vmem>>, vector<1x8x128xf32>
    tpu.vector_store %arg5[%c0_36, %c0_37, %c0_38], %93 {strides = array<i32>} : memref<1x8x128xf32, #tpu.memory_space<vmem>>, vector<1x8x128xf32>,
    return
  }
  func.func @transform_0(%arg0: i32) -> (i32, i32) {
    %c0_i32 = arith.constant 0 : i32
    %c0_i32_0 = arith.constant 0 : i32
    return %arg0, %c0_i32 : i32, i32
  }
  func.func @transform_1(%arg0: i32) -> (i32, i32) {
    %c0_i32 = arith.constant 0 : i32
    %c0_i32_0 = arith.constant 0 : i32
    return %arg0, %c0_i32 : i32, i32
  }
  func.func @transform_2(%arg0: i32) -> (i32, i32) {
    %c0_i32 = arith.constant 0 : i32
    %c0_i32_0 = arith.constant 0 : i32
    return %arg0, %c0_i32 : i32, i32
  }
  func.func @transform_3(%arg0: i32) -> (i32, i32, i32) {
    %c0_i32 = arith.constant 0 : i32
    %c0_i32_0 = arith.constant 0 : i32
    %c0_i32_1 = arith.constant 0 : i32
    return %arg0, %c0_i32, %c0_i32_0 : i32, i32, i32
  }
  func.func @transform_4(%arg0: i32) -> (i32, i32, i32) {
    %c0_i32 = arith.constant 0 : i32
    %c0_i32_0 = arith.constant 0 : i32
    %c0_i32_1 = arith.constant 0 : i32
    return %arg0, %c0_i32, %c0_i32_0 : i32, i32, i32
  }
}

</mosaic_0001>

<llo_original>
// kernel: tpu_custom_call.1
$region0: #{tpu_custom_call.1}
  #allocation0 [shape = 'u32[]', space=smem, size = 0x4, offset = 0x4, fixed_abs, tag = 'smem constant byte address 0x4 - core index']
  #allocation1 [shape = 'u32[144,128]{1,0:T(1,128)}', space=vmem, size = 0x12000, scoped, tag = 'internal scratch']
  %s0 = inlined_call_operand.hbm [shape: f32[8,256], index: 0, kind: input, shape index: {}]
  %s1 = inlined_call_operand.hbm [shape: f32[8,256], index: 1, kind: input, shape index: {}]
  %s2 = inlined_call_operand.hbm [shape: f32[8,256], index: 2, kind: input, shape index: {}]
  %s3 = inlined_call_operand.hbm [shape: f32[1,8,128], index: 3, kind: output, shape index: {0}]
  %s4 = inlined_call_operand.hbm [shape: f32[1,8,128], index: 4, kind: output, shape index: {1}]
  %5 = xla_tuple %s3, %s4
  %s6 = sld [smem:[#allocation0]]
  $region42: #{tpu_custom_call.1} parent=0
    _
  %s8 = ssub.s32 1, %s6
  %s9 = scalar_select 0, %s8, %s6
  $region1: #{tpu_custom_call.1} parent=0
    #allocation2 [shape = 'u8[8192]{0}', space=vmem, size = 0x2000, scoped, tag = 'input window, operand 0, single buffered']
    #allocation3 [shape = 's32[1]{0}', space=sflag, size = 0x4, scoped, tag = 'scoped memory for tpu_custom_call.1']
    #allocation4 [shape = 's32[1]{0}', space=sflag, size = 0x4, scoped, tag = 'scoped memory for tpu_custom_call.1']
    #allocation5 [shape = 'u8[8192]{0}', space=vmem, size = 0x2000, scoped, tag = 'input window, operand 1, single buffered']
    #allocation6 [shape = 's32[1]{0}', space=sflag, size = 0x4, scoped, tag = 'scoped memory for tpu_custom_call.1']
    #allocation7 [shape = 'u8[8192]{0}', space=vmem, size = 0x2000, scoped, tag = 'input window, operand 2, single buffered']
    #allocation8 [shape = 'u8[4096]{0}', space=vmem, size = 0x1000, scoped, tag = 'output window, operand 0, single buffered']
    #allocation9 [shape = 'u8[4096]{0}', space=vmem, size = 0x1000, scoped, tag = 'output window, operand 1, single buffered']
    #allocation10 [shape = 's32[1]{0}', space=sflag, size = 0x4, scoped, tag = 'scoped memory for tpu_custom_call.1']
    %10 = vsyncpa [#allocation3], 0
    %11 = vsyncpa [#allocation6], 0
    %12 = vsyncpa [#allocation4], 0
    %13 = vsyncpa [#allocation10], 0
    // Predicated region
    $region2: #{tpu_custom_call.1} parent=1 // pred_check
      _
    $region3: #{tpu_custom_call.1} parent=1 // pred_check_branch
      %15 = sbr.rel (0) target = $region5
    $region4: #{tpu_custom_call.1} parent=1 // pred_region
      %s17 = ssub.s32 256, 256
      %18 = vsyncadd [#allocation3], %s17
      %s20 = sshll.u32 [#allocation2], 4
      %s21 = int_to_ptr.vmem [resolvable:$true] %s20
      %23 = dma.hbm_to_vmem [thread:$0]  %s0, 256, %s21, [#allocation3]
    $region5: #{tpu_custom_call.1} parent=1 // pred_fallthru
      _
    // Predicated region
    $region6: #{tpu_custom_call.1} parent=1 // pred_check
      _
    $region7: #{tpu_custom_call.1} parent=1 // pred_check_branch
      %25 = sbr.rel (0) target = $region9
    $region8: #{tpu_custom_call.1} parent=1 // pred_region
      %s27 = ssub.s32 256, 256
      %28 = vsyncadd [#allocation6], %s27
      %s30 = sshll.u32 [#allocation5], 4
      %s31 = int_to_ptr.vmem [resolvable:$true] %s30
      %33 = dma.hbm_to_vmem [thread:$0]  %s1, 256, %s31, [#allocation6]
    $region9: #{tpu_custom_call.1} parent=1 // pred_fallthru
      _
    // Predicated region
    $region10: #{tpu_custom_call.1} parent=1 // pred_check
      _
    $region11: #{tpu_custom_call.1} parent=1 // pred_check_branch
      %35 = sbr.rel (0) target = $region13
    $region12: #{tpu_custom_call.1} parent=1 // pred_region
      %s37 = ssub.s32 256, 256
      %38 = vsyncadd [#allocation6], %s37
      %s40 = sshll.u32 [#allocation7], 4
      %s41 = int_to_ptr.vmem [resolvable:$true] %s40
      %43 = dma.hbm_to_vmem [thread:$0]  %s2, 256, %s41, [#allocation6]
    $region13: #{tpu_custom_call.1} parent=1 // pred_fallthru
      _
    // Predicated region
    $region14: #{tpu_custom_call.1} parent=1 // pred_check
      _
    $region15: #{tpu_custom_call.1} parent=1 // pred_check_branch
      %45 = sbr.rel (0) target = $region17
    $region16: #{tpu_custom_call.1} parent=1 // pred_region
      %46 = dma.done [#allocation3], 256
    $region17: #{tpu_custom_call.1} parent=1 // pred_fallthru
      _
    // Predicated region
    $region18: #{tpu_custom_call.1} parent=1 // pred_check
      _
    $region19: #{tpu_custom_call.1} parent=1 // pred_check_branch
      %48 = sbr.rel (0) target = $region21
    $region20: #{tpu_custom_call.1} parent=1 // pred_region
      %49 = dma.done [#allocation6], 256
    $region21: #{tpu_custom_call.1} parent=1 // pred_fallthru
      _
    // Predicated region
    $region22: #{tpu_custom_call.1} parent=1 // pred_check
      _
    $region23: #{tpu_custom_call.1} parent=1 // pred_check_branch
      %51 = sbr.rel (0) target = $region25
    $region24: #{tpu_custom_call.1} parent=1 // pred_region
      %52 = dma.done [#allocation6], 256
    $region25: #{tpu_custom_call.1} parent=1 // pred_fallthru
      _
    %v53 = vld [vmem:[#allocation2] sm:$0xff]
    %v54 = vld [vmem:[#allocation2 + $0x8] sm:$0xff]
    %v55 = vld [vmem:[#allocation5] sm:$0xff]
    %v56 = vld [vmem:[#allocation5 + $0x8] sm:$0xff]
    %v57 = vld [vmem:[#allocation7] sm:$0xff]
    %v58 = vld [vmem:[#allocation7 + $0x8] sm:$0xff]
    %v59 = vmul.f32 %v53, %v53
    %v60 = vmul.f32 %v54, %v54
    %v61 = vadd.f32 %v59, %v60
    %62 = vadd.xlane.f32.xlu0 %v61
    %v63 = vpop.xlane.xlu0 %62
    %v64 = vrsqrt.pop %v63
    %v65 = vmul.f32 %v63, %v64
    %vm66 = vcmp.eq.f32.partialorder %v63, inf
    %v67 = vsel %vm66, %v63, %v65
    %vm68 = vcmp.eq.f32.partialorder %v63, 0.0
    %v69 = vand.u32 %v63, 2147483648
    %v70 = vsel %vm68, %v69, %v67
    %v71 = vadd.f32 %v70, 1e-07
    %v72 = vrcp.pop %v71
    %v73 = vmul.f32 %v72, 1e-05
    %vm74 = vcmp.gt.f32.partialorder %v70, 1e-05
    %v75 = vsel %vm74, %v73, 1.0
    %v76 = vmul.f32 %v75, 100000.0
    %v77 = vmul.f32 %v53, %v76
    %v78 = vmul.f32 %v54, %v76
    %v79 = vmul.f32 %v55, %v55
    %v80 = vmul.f32 %v56, %v56
    %v81 = vadd.f32 %v79, %v80
    %82 = vadd.xlane.f32.xlu0 %v81
    %v83 = vpop.xlane.xlu0 %82
    %v84 = vrsqrt.pop %v83
    %v85 = vmul.f32 %v83, %v84
    %vm86 = vcmp.eq.f32.partialorder %v83, inf
    %v87 = vsel %vm86, %v83, %v85
    %vm88 = vcmp.eq.f32.partialorder %v83, 0.0
    %v89 = vand.u32 %v83, 2147483648
    %v90 = vsel %vm88, %v89, %v87
    %v91 = vadd.f32 %v90, 1e-07
    %v92 = vrcp.pop %v91
    %v93 = vmul.f32 %v92, 1e-05
    %vm94 = vcmp.gt.f32.partialorder %v90, 1e-05
    %v95 = vsel %vm94, %v93, 1.0
    %v96 = vmul.f32 %v95, 100000.0
    %v97 = vmul.f32 %v55, %v96
    %v98 = vmul.f32 %v56, %v96
    %v99 = vsub.f32 %v77, %v97
    %v100 = vsub.f32 %v78, %v98
    %v101 = vmul.f32 %v57, %v57
    %v102 = vmul.f32 %v58, %v58
    %v103 = vadd.f32 %v101, %v102
    %104 = vadd.xlane.f32.xlu0 %v103
    %v105 = vpop.xlane.xlu0 %104
    %v106 = vrsqrt.pop %v105
    %v107 = vmul.f32 %v105, %v106
    %vm108 = vcmp.eq.f32.partialorder %v105, inf
    %v109 = vsel %vm108, %v105, %v107
    %vm110 = vcmp.eq.f32.partialorder %v105, 0.0
    %v111 = vand.u32 %v105, 2147483648
    %v112 = vsel %vm110, %v111, %v109
    %v113 = vadd.f32 %v112, 1e-07
    %v114 = vrcp.pop %v113
    %v115 = vmul.f32 %v114, 1e-05
    %vm116 = vcmp.gt.f32.partialorder %v112, 1e-05
    %v117 = vsel %vm116, %v115, 1.0
    %v118 = vmul.f32 %v117, 100000.0
    %v119 = vmul.f32 %v57, %v118
    %v120 = vmul.f32 %v58, %v118
    %v121 = vsub.f32 %v77, %v119
    %v122 = vsub.f32 %v78, %v120
    %v123 = vmul.f32 %v99, %v99
    %v124 = vmul.f32 %v100, %v100
    %v125 = vadd.f32 %v123, %v124
    %126 = vadd.xlane.f32.xlu0 %v125
    %v127 = vpop.xlane.xlu0 %126
    %v128 = vrsqrt.pop %v127
    %v129 = vmul.f32 %v127, %v128
    %vm130 = vcmp.eq.f32.partialorder %v127, inf
    %v131 = vsel %vm130, %v127, %v129
    %vm132 = vcmp.eq.f32.partialorder %v127, 0.0
    %v133 = vand.u32 %v127, 2147483648
    %v134 = vsel %vm132, %v133, %v131
    %v135 = vmul.f32 %v121, %v121
    %v136 = vmul.f32 %v122, %v122
    %v137 = vadd.f32 %v135, %v136
    %138 = vadd.xlane.f32.xlu0 %v137
    %v139 = vpop.xlane.xlu0 %138
    %v140 = vrsqrt.pop %v139
    %v141 = vmul.f32 %v139, %v140
    %vm142 = vcmp.eq.f32.partialorder %v139, inf
    %v143 = vsel %vm142, %v139, %v141
    %vm144 = vcmp.eq.f32.partialorder %v139, 0.0
    %v145 = vand.u32 %v139, 2147483648
    %v146 = vsel %vm144, %v145, %v143
    %v147 = vsub.f32 %v134, %v146
    %s148 = smul.u32 0, 8
    %v149 = vlaneseq
    %v150 = vshrl.u32 %v149, 7
    %v151 = vstv %s148
    %v152 = vadd.s32 %v151, %v150
    %vm153 = vcmp.lt.s32.totalorder %v152, 8
    %vm154 = vcmp.lt.f32.partialorder %v147, 0.2
    %vm155 = vmand %vm154, %vm153
    %v156 = vadd.f32 %v147, 0.2
    %v157 = vmax.f32 %v156, 0.0
    %v158 = vsel %vm155, %v157, 0.0
    %vm159 = vcmask 7168
    %v160 = vsel %vm159, %v158, 0.0
    %161 = vadd.xlane.f32.xlu0 %v160
    %v162 = vpop.xlane.xlu0 %161
    %v163 = vrot.slane %v162, 4
    %v164 = vadd.f32 %v162, %v163
    %v165 = vrot.slane %v164, 2
    %v166 = vadd.f32 %v164, %v165
    %v167 = vrot.slane %v166, 1
    %v168 = vadd.f32 %v166, %v167
    %s169 = vtos %v168
    %v170 = vsel %vm155, 1.0, 0.0
    %v171 = vsel %vm159, %v170, 0.0
    %172 = vadd.xlane.f32.xlu0 %v171
    %v173 = vpop.xlane.xlu0 %172
    %v174 = vrot.slane %v173, 4
    %v175 = vadd.f32 %v173, %v174
    %v176 = vrot.slane %v175, 2
    %v177 = vadd.f32 %v175, %v176
    %v178 = vrot.slane %v177, 1
    %v179 = vadd.f32 %v177, %v178
    %s180 = vtos %v179
    %v181 = vstv %s169
    %182 = vst [vmem:[#allocation8] sm:$0xff] %v181
    %v183 = vstv %s180
    %184 = vst [vmem:[#allocation9] sm:$0xff] %v183
    // Predicated region
    $region26: #{tpu_custom_call.1} parent=1 // pred_check
      _
    $region27: #{tpu_custom_call.1} parent=1 // pred_check_branch
      %186 = sbr.rel (0) target = $region29
    $region28: #{tpu_custom_call.1} parent=1 // pred_region
      %s188 = ssub.s32 128, 128
      %189 = vsyncadd [#allocation4], %s188
      %s191 = sshll.u32 [#allocation8], 4
      %s192 = int_to_ptr.vmem [resolvable:$true] %s191
      %194 = dma.vmem_to_hbm [thread:$0]  %s192, 128, %s3, [#allocation4]
    $region29: #{tpu_custom_call.1} parent=1 // pred_fallthru
      _
    // Predicated region
    $region30: #{tpu_custom_call.1} parent=1 // pred_check
      _
    $region31: #{tpu_custom_call.1} parent=1 // pred_check_branch
      %196 = sbr.rel (0) target = $region33
    $region32: #{tpu_custom_call.1} parent=1 // pred_region
      %s198 = ssub.s32 128, 128
      %199 = vsyncadd [#allocation10], %s198
      %s201 = sshll.u32 [#allocation9], 4
      %s202 = int_to_ptr.vmem [resolvable:$true] %s201
      %204 = dma.vmem_to_hbm [thread:$0]  %s202, 128, %s4, [#allocation10]
    $region33: #{tpu_custom_call.1} parent=1 // pred_fallthru
      _
    // Predicated region
    $region34: #{tpu_custom_call.1} parent=1 // pred_check
      _
    $region35: #{tpu_custom_call.1} parent=1 // pred_check_branch
      %206 = sbr.rel (0) target = $region37
    $region36: #{tpu_custom_call.1} parent=1 // pred_region
      %207 = dma.done [#allocation4], 128
    $region37: #{tpu_custom_call.1} parent=1 // pred_fallthru
      _
    // Predicated region
    $region38: #{tpu_custom_call.1} parent=1 // pred_check
      _
    $region39: #{tpu_custom_call.1} parent=1 // pred_check_branch
      %209 = sbr.rel (0) target = $region41
    $region40: #{tpu_custom_call.1} parent=1 // pred_region
      %210 = dma.done [#allocation10], 128
    $region41: #{tpu_custom_call.1} parent=1 // pred_fallthru
      _
    %211 = vsyncpa [#allocation3], 1
    %212 = vsyncpa [#allocation6], 1
    %213 = vsyncpa [#allocation4], 1
    %214 = vsyncpa [#allocation10], 1

</llo_original>
